<compile_context>
chip_gen: v7x
topology: tpu7x:2x2x1
jax: 0.10.0
libtpu: 0.0.40
codegen_flags: <defaults>
</compile_context>

<pallas_src>
import functools

import jax
import jax.numpy as jnp
from jax.experimental import pallas as pl
from jax.experimental.pallas import tpu as pltpu

_LANE = 128
_TILE_TARGET_BYTES = 4 << 20            # per sublane-padded input block
_ACC_WIDTHS = (4096, 2048, 1024, 512, 256, 128)


def _cdiv(a, b):
    return (a + b - 1) // b


def _round_up(a, b):
    return _cdiv(a, b) * b


def _sublane_pack(itemsize):
    # rows per 32-bit sublane group: f32 -> 8, bf16 -> 16, int8 -> 32
    return 8 * max(1, 4 // int(itemsize))


def _padded_rows(rows, itemsize):
    return _round_up(rows, _sublane_pack(itemsize))


def _masked_l1_kernel(*refs, use_mask, hw, tile, acc_w, tiles_per_shard, ragged):
    if use_mask:
        x_ref, t_ref, m_ref, out_g_ref, out_m_ref, acc_g, acc_m = refs
    else:
        x_ref, t_ref, out_g_ref, acc_g = refs
        m_ref = out_m_ref = acc_m = None

    b = pl.program_id(1)
    t = pl.program_id(2)
    is_first = (b == 0) & (t == 0)
    is_last = ((b == pl.num_programs(1) - 1)
               & (t == pl.num_programs(2) - 1))

    @pl.when(is_first)
    def _():
        acc_g[...] = jnp.zeros_like(acc_g)
        if use_mask:
            acc_m[...] = jnp.zeros_like(acc_m)

    if ragged:
        # Logical (uncapped) tile index along hw.  The index_map clamps the
        # DMA index so duplicate / past-the-end tiles still read in-bounds
        # data; `limit` then zeroes their contribution here.
        t_logical = pl.program_id(0) * tiles_per_shard + t
        limit = hw - t_logical * tile       # number of valid lanes in block
    else:
        limit = None

    # Fold the (C, tile) block into a small (C, acc_w) partial using pure
    # elementwise VPU ops over static lane-chunks of the refs (bounded
    # temporaries, no full-block accumulator read-modify-write per step).
    n_chunks = tile // acc_w
    pg = None
    pm = None
    for i in range(n_chunks):               # static python loop (unrolled)
        sl = slice(i * acc_w, (i + 1) * acc_w)
        x = x_ref[:, sl].astype(jnp.float32)     # (C, acc_w)
        y = t_ref[:, sl].astype(jnp.float32)
        a = jnp.abs(x - y)
        if ragged:
            lane = (jax.lax.broadcasted_iota(jnp.int32, (1, acc_w), 1)
                    + i * acc_w)
            valid = lane < limit
            a = jnp.where(valid, a, 0.0)     # select: garbage/NaN lanes -> 0
        pg = a if pg is None else pg + a
        if use_mask:
            m = jnp.abs(m_ref[:, sl].astype(jnp.float32))   # (1, acc_w)
            if ragged:
                m = jnp.where(valid, m, 0.0)
            # exact module semantics: |x*m - t*m| == |x - t| * |m|
            am = a * m                        # mask row broadcast over C rows
            pm = am if pm is None else pm + am

    acc_g[...] += pg
    if use_mask:
        acc_m[...] += pm

    @pl.when(is_last)
    def _():
        out_g_ref[...] = jnp.sum(acc_g[...], keepdims=True)
        if use_mask:
            out_m_ref[...] = jnp.sum(acc_m[...], keepdims=True)


def masked_l1_loss(inputs, mask, targets, *, use_mask=True, alpha=9.0,
                   num_shards=1, core_parallel=False, tile_lanes=None):
    """inputs, targets: (B, C, H, W); mask: (B, H, W). Returns scalar f32.

    num_shards / core_parallel: on v7x use num_shards=2, core_parallel=True to
    split the reduction across both TensorCores (per-shard partial sums are
    combined in the wrapper).  tile_lanes optionally overrides the spatial
    tile width (multiple of 128), mainly for testing the ragged-tile path.
    """
    B, C, H, W = inputs.shape
    assert targets.shape == inputs.shape
    hw = H * W
    n_elems = B * C * hw

    x = inputs.reshape(B, C, hw)              # free reshape (contiguous)
    y = targets.reshape(B, C, hw)
    in_isz = jnp.dtype(inputs.dtype).itemsize

    # ---- spatial tiling (no padding; ragged last tile handled in-kernel) ----
    if tile_lanes is not None:
        tl = max(_LANE, (int(tile_lanes) // _LANE) * _LANE)
        tile = hw if tl >= hw else tl
    elif hw <= 4096:
        tile = hw                             # single full-extent block
    else:
        bytes_per_lane = _padded_rows(C, in_isz) * in_isz   # sublane-padded
        cap = max(4096, (_TILE_TARGET_BYTES // bytes_per_lane) // 4096 * 4096)
        tile = min(cap, (hw // 4096) * 4096)
    n_tiles = _cdiv(hw, tile)
    acc_w = next((w for w in _ACC_WIDTHS if tile % w == 0), tile)

    # ---- optional shard axis (per-shard partial sums) ----
    num_shards = max(1, int(num_shards))
    tps = _cdiv(n_tiles, num_shards)          # tiles handled per shard
    need_cap = tps * num_shards != n_tiles    # some shards see duplicate tiles
    ragged = (hw % tile != 0) or need_cap

    def _hw_idx(s, t):
        tl_idx = s * tps + t
        if need_cap:                          # keep the DMA in bounds
            tl_idx = jnp.minimum(tl_idx, n_tiles - 1)
        return tl_idx

    in_specs = [
        pl.BlockSpec((None, C, tile), lambda s, b, t: (b, 0, _hw_idx(s, t))),
        pl.BlockSpec((None, C, tile), lambda s, b, t: (b, 0, _hw_idx(s, t))),
    ]
    operands = [x, y]
    out_shapes = [jax.ShapeDtypeStruct((num_shards, 1, 1), jnp.float32)]
    out_specs = [pl.BlockSpec((None, 1, 1), lambda s, b, t: (s, 0, 0))]
    scratch = [pltpu.VMEM((C, acc_w), jnp.float32)]

    m_block_bytes = 0
    mask_nbytes = 0
    if use_mask:
        assert mask.shape == (B, H, W)
        if mask.dtype == jnp.bool_:
            mask = mask.astype(jnp.int8)      # keep mask HBM traffic at 1 B/px
        m = mask.reshape(B, 1, hw)
        m_isz = jnp.dtype(m.dtype).itemsize
        in_specs.append(
            pl.BlockSpec((None, 1, tile), lambda s, b, t: (b, 0, _hw_idx(s, t))))
        operands.append(m)
        out_shapes.append(jax.ShapeDtypeStruct((num_shards, 1, 1), jnp.float32))
        out_specs.append(pl.BlockSpec((None, 1, 1), lambda s, b, t: (s, 0, 0)))
        scratch.append(pltpu.VMEM((C, acc_w), jnp.float32))
        m_block_bytes = _padded_rows(1, m_isz) * tile * m_isz
        mask_nbytes = m.nbytes

    # VMEM budget from actual (sublane-padded) block bytes: 2x double-buffered
    # x and t blocks, double-buffered mask block, tiny accumulators + margin.
    x_block_bytes = _padded_rows(C, in_isz) * tile * in_isz
    acc_bytes = len(scratch) * _padded_rows(C, 4) * acc_w * 4
    vmem_need = 4 * x_block_bytes + 2 * m_block_bytes + acc_bytes + (8 << 20)
    vmem_limit = int(min(max(vmem_need, 24 << 20), 56 << 20))

    lead_sem = (pltpu.CORE_PARALLEL
                if (num_shards > 1 and core_parallel) else "arbitrary")

    kernel = functools.partial(
        _masked_l1_kernel, use_mask=use_mask, hw=hw, tile=tile, acc_w=acc_w,
        tiles_per_shard=tps, ragged=ragged)

    outs = pl.pallas_call(
        kernel,
        out_shape=tuple(out_shapes),
        grid_spec=pltpu.PrefetchScalarGridSpec(
            num_scalar_prefetch=0,
            grid=(num_shards, B, tps),
            in_specs=in_specs,
            out_specs=tuple(out_specs),
            scratch_shapes=scratch,
        ),
        compiler_params=pltpu.CompilerParams(
            dimension_semantics=(lead_sem, "arbitrary", "arbitrary"),
            vmem_limit_bytes=vmem_limit,
        ),
        cost_estimate=pl.CostEstimate(
            flops=(6 if use_mask else 3) * n_elems,
            transcendentals=0,
            bytes_accessed=int(x.nbytes + y.nbytes + mask_nbytes
                               + 4 * num_shards * len(out_shapes)),
        ),
    )(*operands)

    inv_n = jnp.float32(1.0 / n_elems)
    global_loss = jnp.sum(outs[0]) * inv_n
    if not use_mask:
        return global_loss
    mask_loss = jnp.sum(outs[1]) * inv_n
    return ((global_loss + jnp.float32(alpha) * mask_loss)
            / jnp.float32(1.0 + alpha))


def masked_l1_loss_ref(inputs, mask, targets, *, use_mask=True, alpha=9.0):
    """Pure-JAX reference mirroring the PyTorch module."""
    global_loss = jnp.mean(jnp.abs(inputs - targets))
    if not use_mask:
        return global_loss
    m = jnp.broadcast_to(mask[:, None, :, :].astype(inputs.dtype), inputs.shape)
    mask_loss = jnp.mean(jnp.abs(inputs * m - targets * m))
    return (global_loss + alpha * mask_loss) / (1.0 + alpha)


if __name__ == "__main__":
    key = jax.random.PRNGKey(0)
    k1, k2, k3 = jax.random.split(key, 3)

    B, C, H, W = 2, 3, 16, 16
    inputs = jax.random.normal(k1, (B, C, H, W), dtype=jnp.float32)
    targets = jax.random.normal(k2, (B, C, H, W), dtype=jnp.float32)
    mask = (jax.random.uniform(k3, (B, H, W), dtype=jnp.float32) > 0.5).astype(
        jnp.float32)

    loss = jax.block_until_ready(
        masked_l1_loss(inputs, mask, targets, use_mask=True, alpha=9.0))
    ref = masked_l1_loss_ref(inputs, mask, targets, use_mask=True, alpha=9.0)
    assert jnp.allclose(loss, ref, rtol=1e-5, atol=1e-6), (loss, ref)

    # use_mask=False path: the mask operand is not passed to the kernel at all
    loss_nm = jax.block_until_ready(
        masked_l1_loss(inputs, mask, targets, use_mask=False))
    ref_nm = masked_l1_loss_ref(inputs, mask, targets, use_mask=False)
    assert jnp.allclose(loss_nm, ref_nm, rtol=1e-5, atol=1e-6), (loss_nm, ref_nm)

    # narrow on-wire mask dtype (int8) -> identical result, 4x less mask HBM
    loss_i8 = jax.block_until_ready(
        masked_l1_loss(inputs, mask.astype(jnp.int8), targets,
                       use_mask=True, alpha=9.0))
    assert jnp.allclose(loss_i8, ref, rtol=1e-5, atol=1e-6), (loss_i8, ref)

    # Ragged H*W (380 px, not a multiple of the 128-lane tile), multiple tiles
    # and 2 shards: exercises the no-pad ragged-lane masking and the shard
    # tile-index clamping (no wrapper-side jnp.pad anywhere).
    B2, H2, W2 = 2, 19, 20
    i2 = jax.random.normal(k1, (B2, C, H2, W2), dtype=jnp.float32)
    t2 = jax.random.normal(k2, (B2, C, H2, W2), dtype=jnp.float32)
    m2 = (jax.random.uniform(k3, (B2, H2, W2), dtype=jnp.float32) > 0.5).astype(
        jnp.float32)
    loss2 = jax.block_until_ready(
        masked_l1_loss(i2, m2, t2, num_shards=2, tile_lanes=128))
    ref2 = masked_l1_loss_ref(i2, m2, t2)
    assert jnp.allclose(loss2, ref2, rtol=1e-5, atol=1e-6), (loss2, ref2)

    print("KERNEL_OK")
</pallas_src>

<mosaic_0001>
module attributes {stable_mosaic.version = 11 : i64} {
  func.func @_masked_l1_kernel(%arg0: i32, %arg1: i32, %arg2: i32, %arg3: memref<1x3x256xf32, #tpu.memory_space<vmem>>, %arg4: memref<1x3x256xf32, #tpu.memory_space<vmem>>, %arg5: memref<1x1x256xf32, #tpu.memory_space<vmem>>, %arg6: memref<1x1x1xf32, #tpu.memory_space<vmem>>, %arg7: memref<1x1x1xf32, #tpu.memory_space<vmem>>, %arg8: memref<3x256xf32, #tpu.memory_space<vmem>>, %arg9: memref<3x256xf32, #tpu.memory_space<vmem>>) attributes {dimension_semantics = [#tpu.dimension_semantics<arbitrary>, #tpu.dimension_semantics<arbitrary>, #tpu.dimension_semantics<arbitrary>], iteration_bounds = array<i64: 1, 2, 1>, scalar_prefetch = 0 : i64, scratch_operands = 2 : i64, tpu.core_type = #tpu.core_type<tc>, window_params = [{transform_indices = @transform_0, window_bounds = array<i64: 1, 3, 256>}, {transform_indices = @transform_1, window_bounds = array<i64: 1, 3, 256>}, {transform_indices = @transform_2, window_bounds = array<i64: 1, 1, 256>}, {transform_indices = @transform_3, window_bounds = array<i64: 1, 1, 1>}, {transform_indices = @transform_4, window_bounds = array<i64: 1, 1, 1>}]} {
    %c0_i32 = arith.constant 0 : i32
    %0 = arith.cmpi eq, %arg1, %c0_i32 : i32
    %c0_i32_0 = arith.constant 0 : i32
    %1 = arith.cmpi eq, %arg2, %c0_i32_0 : i32
    %2 = arith.andi %0, %1 : i1
    %c1_i32 = arith.constant 1 : i32
    %3 = arith.cmpi eq, %arg1, %c1_i32 : i32
    %c0_i32_1 = arith.constant 0 : i32
    %4 = arith.cmpi eq, %arg2, %c0_i32_1 : i32
    %5 = arith.andi %3, %4 : i1
    %6 = arith.extui %2 : i1 to i32
    %c0_i32_2 = arith.constant 0 : i32
    %7 = arith.cmpi ne, %6, %c0_i32_2 : i32
    scf.if %7 {
      %cst = arith.constant 0.000000e+00 : f32
      %27 = vector.broadcast %cst : f32 to vector<3x256xf32>
      %c0_20 = arith.constant 0 : index
      %c0_21 = arith.constant 0 : index
      %28 = vector.load %arg8[%c0_20, %c0_21] : memref<3x256xf32, #tpu.memory_space<vmem>>, vector<3x256xf32>
      tpu.vector_store %arg8[%c0_20, %c0_21], %27 {strides = array<i32>} : memref<3x256xf32, #tpu.memory_space<vmem>>, vector<3x256xf32>,
      %cst_22 = arith.constant 0.000000e+00 : f32
      %29 = vector.broadcast %cst_22 : f32 to vector<3x256xf32>
      %c0_23 = arith.constant 0 : index
      %c0_24 = arith.constant 0 : index
      %30 = vector.load %arg9[%c0_23, %c0_24] : memref<3x256xf32, #tpu.memory_space<vmem>>, vector<3x256xf32>
      tpu.vector_store %arg9[%c0_23, %c0_24], %29 {strides = array<i32>} : memref<3x256xf32, #tpu.memory_space<vmem>>, vector<3x256xf32>,
    } else {
    }
    %c0 = arith.constant 0 : index
    %c0_3 = arith.constant 0 : index
    %c0_4 = arith.constant 0 : index
    %8 = vector.load %arg3[%c0, %c0_3, %c0_4] : memref<1x3x256xf32, #tpu.memory_space<vmem>>, vector<1x3x256xf32>
    %9 = vector.shape_cast %8 : vector<1x3x256xf32> to vector<3x256xf32>
    %c0_5 = arith.constant 0 : index
    %c0_6 = arith.constant 0 : index
    %c0_7 = arith.constant 0 : index
    %10 = vector.load %arg4[%c0_5, %c0_6, %c0_7] : memref<1x3x256xf32, #tpu.memory_space<vmem>>, vector<1x3x256xf32>
    %11 = vector.shape_cast %10 : vector<1x3x256xf32> to vector<3x256xf32>
    %12 = arith.subf %9, %11 : vector<3x256xf32>
    %13 = math.absf %12 : vector<3x256xf32>
    %c0_8 = arith.constant 0 : index
    %c0_9 = arith.constant 0 : index
    %c0_10 = arith.constant 0 : index
    %14 = vector.load %arg5[%c0_8, %c0_9, %c0_10] : memref<1x1x256xf32, #tpu.memory_space<vmem>>, vector<1x1x256xf32>
    %15 = vector.shape_cast %14 : vector<1x1x256xf32> to vector<1x256xf32>
    %16 = math.absf %15 : vector<1x256xf32>
    %17 = vector.broadcast %16 : vector<1x256xf32> to vector<3x256xf32>
    %18 = arith.mulf %13, %17 : vector<3x256xf32>
    %c0_11 = arith.constant 0 : index
    %c0_12 = arith.constant 0 : index
    %19 = vector.load %arg8[%c0_11, %c0_12] : memref<3x256xf32, #tpu.memory_space<vmem>>, vector<3x256xf32>
    %20 = arith.addf %19, %13 : vector<3x256xf32>
    %c0_13 = arith.constant 0 : index
    %c0_14 = arith.constant 0 : index
    %21 = vector.load %arg8[%c0_13, %c0_14] : memref<3x256xf32, #tpu.memory_space<vmem>>, vector<3x256xf32>
    tpu.vector_store %arg8[%c0_13, %c0_14], %20 {strides = array<i32>} : memref<3x256xf32, #tpu.memory_space<vmem>>, vector<3x256xf32>,
    %c0_15 = arith.constant 0 : index
    %c0_16 = arith.constant 0 : index
    %22 = vector.load %arg9[%c0_15, %c0_16] : memref<3x256xf32, #tpu.memory_space<vmem>>, vector<3x256xf32>
    %23 = arith.addf %22, %18 : vector<3x256xf32>
    %c0_17 = arith.constant 0 : index
    %c0_18 = arith.constant 0 : index
    %24 = vector.load %arg9[%c0_17, %c0_18] : memref<3x256xf32, #tpu.memory_space<vmem>>, vector<3x256xf32>
    tpu.vector_store %arg9[%c0_17, %c0_18], %23 {strides = array<i32>} : memref<3x256xf32, #tpu.memory_space<vmem>>, vector<3x256xf32>,
    %25 = arith.extui %5 : i1 to i32
    %c0_i32_19 = arith.constant 0 : i32
    %26 = arith.cmpi ne, %25, %c0_i32_19 : i32
    scf.if %26 {
      %c0_20 = arith.constant 0 : index
      %c0_21 = arith.constant 0 : index
      %27 = vector.load %arg8[%c0_20, %c0_21] : memref<3x256xf32, #tpu.memory_space<vmem>>, vector<3x256xf32>
      %28 = vector.shape_cast %27 : vector<3x256xf32> to vector<1x3x256xf32>
      %cst = arith.constant dense<0.000000e+00> : vector<1xf32>
      %29 = vector.multi_reduction <add>, %28, %cst [1, 2] : vector<1x3x256xf32> to vector<1xf32>
      %30 = vector.shape_cast %29 : vector<1xf32> to vector<1x1x1xf32>
      %31 = vector.extract %30[0, 0, 0] : f32 from vector<1x1x1xf32>
      %32 = vector.broadcast %31 : f32 to vector<1x1xf32>
      %c0_22 = arith.constant 0 : index
      %c0_23 = arith.constant 0 : index
      %c0_24 = arith.constant 0 : index
      %33 = vector.load %arg6[%c0_22, %c0_23, %c0_24] : memref<1x1x1xf32, #tpu.memory_space<vmem>>, vector<1x1x1xf32>
      %34 = vector.shape_cast %33 : vector<1x1x1xf32> to vector<1x1xf32>
      %35 = vector.shape_cast %32 : vector<1x1xf32> to vector<1x1x1xf32>
      tpu.vector_store %arg6[%c0_22, %c0_23, %c0_24], %35 {strides = array<i32>} : memref<1x1x1xf32, #tpu.memory_space<vmem>>, vector<1x1x1xf32>,
      %c0_25 = arith.constant 0 : index
      %c0_26 = arith.constant 0 : index
      %36 = vector.load %arg9[%c0_25, %c0_26] : memref<3x256xf32, #tpu.memory_space<vmem>>, vector<3x256xf32>
      %37 = vector.shape_cast %36 : vector<3x256xf32> to vector<1x3x256xf32>
      %cst_27 = arith.constant dense<0.000000e+00> : vector<1xf32>
      %38 = vector.multi_reduction <add>, %37, %cst_27 [1, 2] : vector<1x3x256xf32> to vector<1xf32>
      %39 = vector.shape_cast %38 : vector<1xf32> to vector<1x1x1xf32>
      %40 = vector.extract %39[0, 0, 0] : f32 from vector<1x1x1xf32>
      %41 = vector.broadcast %40 : f32 to vector<1x1xf32>
      %c0_28 = arith.constant 0 : index
      %c0_29 = arith.constant 0 : index
      %c0_30 = arith.constant 0 : index
      %42 = vector.load %arg7[%c0_28, %c0_29, %c0_30] : memref<1x1x1xf32, #tpu.memory_space<vmem>>, vector<1x1x1xf32>
      %43 = vector.shape_cast %42 : vector<1x1x1xf32> to vector<1x1xf32>
      %44 = vector.shape_cast %41 : vector<1x1xf32> to vector<1x1x1xf32>
      tpu.vector_store %arg7[%c0_28, %c0_29, %c0_30], %44 {strides = array<i32>} : memref<1x1x1xf32, #tpu.memory_space<vmem>>, vector<1x1x1xf32>,
    } else {
    }
    return
  }
  func.func @transform_0(%arg0: i32, %arg1: i32, %arg2: i32) -> (i32, i32, i32) {
    %c1_i32 = arith.constant 1 : i32
    %0 = arith.muli %arg0, %c1_i32 : i32
    %1 = arith.addi %0, %arg2 : i32
    %c0_i32 = arith.constant 0 : i32
    %c0_i32_0 = arith.constant 0 : i32
    return %arg1, %c0_i32, %1 : i32, i32, i32
  }
  func.func @transform_1(%arg0: i32, %arg1: i32, %arg2: i32) -> (i32, i32, i32) {
    %c1_i32 = arith.constant 1 : i32
    %0 = arith.muli %arg0, %c1_i32 : i32
    %1 = arith.addi %0, %arg2 : i32
    %c0_i32 = arith.constant 0 : i32
    %c0_i32_0 = arith.constant 0 : i32
    return %arg1, %c0_i32, %1 : i32, i32, i32
  }
  func.func @transform_2(%arg0: i32, %arg1: i32, %arg2: i32) -> (i32, i32, i32) {
    %c1_i32 = arith.constant 1 : i32
    %0 = arith.muli %arg0, %c1_i32 : i32
    %1 = arith.addi %0, %arg2 : i32
    %c0_i32 = arith.constant 0 : i32
    %c0_i32_0 = arith.constant 0 : i32
    return %arg1, %c0_i32, %1 : i32, i32, i32
  }
  func.func @transform_3(%arg0: i32, %arg1: i32, %arg2: i32) -> (i32, i32, i32) {
    %c0_i32 = arith.constant 0 : i32
    %c0_i32_0 = arith.constant 0 : i32
    %c0_i32_1 = arith.constant 0 : i32
    return %arg0, %c0_i32, %c0_i32_0 : i32, i32, i32
  }
  func.func @transform_4(%arg0: i32, %arg1: i32, %arg2: i32) -> (i32, i32, i32) {
    %c0_i32 = arith.constant 0 : i32
    %c0_i32_0 = arith.constant 0 : i32
    %c0_i32_1 = arith.constant 0 : i32
    return %arg0, %c0_i32, %c0_i32_0 : i32, i32, i32
  }
}

</mosaic_0001>

<llo_original>
// kernel: tpu_custom_call.1
$region0: #{tpu_custom_call.1}
  #allocation0 [shape = 'u32[]', space=smem, size = 0x4, offset = 0x4, fixed_abs, tag = 'smem constant byte address 0x4 - core index']
  #allocation1 [shape = 'u32[144,128]{1,0:T(1,128)}', space=vmem, size = 0x12000, scoped, tag = 'internal scratch']
  #allocation2 [shape = 'f32[3,256]{1,0:T(4,128)}', space=vmem, size = 0x1000, scoped, tag = 'scratch operand']
  #allocation3 [shape = 'f32[3,256]{1,0:T(4,128)}', space=vmem, size = 0x1000, scoped, tag = 'scratch operand']
  %s0 = inlined_call_operand.vmem [shape: f32[2,3,256], index: 0, kind: input, shape index: {}]
  %s1 = inlined_call_operand.vmem [shape: f32[2,3,256], index: 1, kind: input, shape index: {}]
  %s2 = inlined_call_operand.vmem [shape: f32[2,1,256], index: 2, kind: input, shape index: {}]
  %s3 = inlined_call_operand.hbm [shape: f32[1,1,1], index: 3, kind: output, shape index: {0}]
  %s4 = inlined_call_operand.hbm [shape: f32[1,1,1], index: 4, kind: output, shape index: {1}]
  %5 = xla_tuple %s3, %s4
  %s6 = sld [smem:[#allocation0]]
  $region61: #{tpu_custom_call.1} parent=0
    _
  %s8 = ssub.s32 1, %s6
  %s9 = scalar_select 0, %s8, %s6
  $region1: #{tpu_custom_call.1} parent=0
    #allocation4 [shape = 'u8[512]{0}', space=vmem, size = 0x400, scoped, tag = 'output window, operand 0, single buffered']
    #allocation5 [shape = 's32[2]{0}', space=sflag, size = 0x8, scoped, tag = 'scoped memory for tpu_custom_call.1']
    #allocation6 [shape = 'u8[512]{0}', space=vmem, size = 0x400, scoped, tag = 'output window, operand 1, single buffered']
    #allocation7 [shape = 's32[1]{0}', space=sflag, size = 0x4, scoped, tag = 'scoped memory for tpu_custom_call.1']
    %10 = vsyncpa [#allocation5], 0
    %11 = vsyncpa [#allocation7], 0
    loop: start=0, step=1, limit=4
    $region2: #{tpu_custom_call.1} parent=1 // loop_pre_header
      _
    $region3: #{tpu_custom_call.1} parent=1 // loop_header
      %s13 = sphi 0, %s17
      %p14 = scmp.ge.s32.totalorder %s13, 4
      %s20 = sphi 0, %s39
      %s21 = sphi 0, %s35
      %s22 = sphi 0, %s31
      %s23 = sphi 0, %s20
      %s24 = sphi 0, %s21
      %s25 = sphi 0, %s22
      %s26 = sphi 0, %s23
      %s27 = sphi 0, %s24
      %s28 = sphi 0, %s25
      %s46 = sphi 0, %s48
      %s49 = sphi 0, %s46
      %s50 = sphi 0, %s49
      %s66 = sphi 0, %s50
      %s76 = sphi 0, %s78
      %s79 = sphi 0, %s76
      %s80 = sphi 0, %s79
      %s96 = sphi 0, %s80
      %s106 = sphi 0, %s108
      %s109 = sphi 0, %s106
      %s110 = sphi 0, %s109
      %s126 = sphi 0, %s110
      %s132 = sphi 0, %s134
      %s135 = sphi 0, %s132
      %s136 = sphi 0, %s135
      %s152 = sphi 0, %s136
      %s158 = sphi 0, %s160
      %s161 = sphi 0, %s158
      %s162 = sphi 0, %s161
      %s178 = sphi 0, %s162
    $region4: #{tpu_custom_call.1} parent=1 // loop_header_branch
      %16 = sbr.rel (%p14) target = $region8
    $region5: #{tpu_custom_call.1} parent=1 // loop_body
      %s18 = ssub.s32 %s13, 1
      %s19 = ssub.s32 %s13, 2
      %s29 = sadd.s32 1, %s22
      %p30 = scmp.ge.s32.totalorder %s29, 1
      %s31 = scalar_select %p30, 0, %s29
      %s32 = sadd.s32 1, %s21
      %s33 = scalar_select %p30, %s32, %s21
      %p34 = scmp.ge.s32.totalorder %s33, 2
      %s35 = scalar_select %p34, 0, %s33
      %s36 = sadd.s32 1, %s20
      %s37 = scalar_select %p34, %s36, %s20
      %p38 = scmp.ge.s32.totalorder %s37, 1
      %s39 = scalar_select %p38, 0, %s37
      %s40 = sadd.s32 %s20, %s22
      %s41 = sadd.s32 %s39, %s31
      %s42 = ssub.s32 %s21, %s35
      %s43 = ssub.s32 %s40, %s41
      %s44 = sor.u32 %s42, %s43
      %p45 = scmp.eq.s32.totalorder %s44, 0
      %s47 = sadd.s32 %s46, 1
      %s48 = scalar_select %p45, %s46, %s47
      %p51 = pneg %p45
      %p52 = scmp.eq.s32.totalorder %s13, 1
      %p53 = por %p51, %p52
      %p54 = scmp.ne.s32.totalorder %s46, %s49
      %p55 = scmp.eq.s32.totalorder %s13, 0
      %p56 = por %p54, %p55
      %p57 = scmp.ne.s32.totalorder %s46, %s49
      %p58 = scmp.eq.s32.totalorder %s18, 1
      %p59 = por %p57, %p58
      %p60 = scmp.ne.s32.totalorder %s49, %s50
      %p61 = scmp.eq.s32.totalorder %s18, 0
      %p62 = por %p60, %p61
      %p63 = scmp.ne.s32.totalorder %s49, %s50
      %p64 = scmp.eq.s32.totalorder %s19, 1
      %p65 = por %p63, %p64
      %p67 = scmp.ne.s32.totalorder %s50, %s66
      %p68 = scmp.eq.s32.totalorder %s19, 0
      %p69 = por %p67, %p68
      %s70 = sadd.s32 %s20, %s22
      %s71 = sadd.s32 %s39, %s31
      %s72 = ssub.s32 %s21, %s35
      %s73 = ssub.s32 %s70, %s71
      %s74 = sor.u32 %s72, %s73
      %p75 = scmp.eq.s32.totalorder %s74, 0
      %s77 = sadd.s32 %s76, 1
      %s78 = scalar_select %p75, %s76, %s77
      %p81 = pneg %p75
      %p82 = scmp.eq.s32.totalorder %s13, 1
      %p83 = por %p81, %p82
      %p84 = scmp.ne.s32.totalorder %s76, %s79
      %p85 = scmp.eq.s32.totalorder %s13, 0
      %p86 = por %p84, %p85
      %p87 = scmp.ne.s32.totalorder %s76, %s79
      %p88 = scmp.eq.s32.totalorder %s18, 1
      %p89 = por %p87, %p88
      %p90 = scmp.ne.s32.totalorder %s79, %s80
      %p91 = scmp.eq.s32.totalorder %s18, 0
      %p92 = por %p90, %p91
      %p93 = scmp.ne.s32.totalorder %s79, %s80
      %p94 = scmp.eq.s32.totalorder %s19, 1
      %p95 = por %p93, %p94
      %p97 = scmp.ne.s32.totalorder %s80, %s96
      %p98 = scmp.eq.s32.totalorder %s19, 0
      %p99 = por %p97, %p98
      %s100 = sadd.s32 %s20, %s22
      %s101 = sadd.s32 %s39, %s31
      %s102 = ssub.s32 %s21, %s35
      %s103 = ssub.s32 %s100, %s101
      %s104 = sor.u32 %s102, %s103
      %p105 = scmp.eq.s32.totalorder %s104, 0
      %s107 = sadd.s32 %s106, 1
      %s108 = scalar_select %p105, %s106, %s107
      %p111 = pneg %p105
      %p112 = scmp.eq.s32.totalorder %s13, 1
      %p113 = por %p111, %p112
      %p114 = scmp.ne.s32.totalorder %s106, %s109
      %p115 = scmp.eq.s32.totalorder %s13, 0
      %p116 = por %p114, %p115
      %p117 = scmp.ne.s32.totalorder %s106, %s109
      %p118 = scmp.eq.s32.totalorder %s18, 1
      %p119 = por %p117, %p118
      %p120 = scmp.ne.s32.totalorder %s109, %s110
      %p121 = scmp.eq.s32.totalorder %s18, 0
      %p122 = por %p120, %p121
      %p123 = scmp.ne.s32.totalorder %s109, %s110
      %p124 = scmp.eq.s32.totalorder %s19, 1
      %p125 = por %p123, %p124
      %p127 = scmp.ne.s32.totalorder %s110, %s126
      %p128 = scmp.eq.s32.totalorder %s19, 0
      %p129 = por %p127, %p128
      %s130 = ssub.s32 %s20, %s39
      %p131 = scmp.eq.s32.totalorder %s130, 0
      %s133 = sadd.s32 %s132, 1
      %s134 = scalar_select %p131, %s132, %s133
      %p137 = pneg %p131
      %p138 = scmp.eq.s32.totalorder %s13, 1
      %p139 = por %p137, %p138
      %p140 = scmp.ne.s32.totalorder %s132, %s135
      %p141 = scmp.eq.s32.totalorder %s13, 0
      %p142 = por %p140, %p141
      %p143 = scmp.ne.s32.totalorder %s132, %s135
      %p144 = scmp.eq.s32.totalorder %s18, 1
      %p145 = por %p143, %p144
      %p146 = scmp.ne.s32.totalorder %s135, %s136
      %p147 = scmp.eq.s32.totalorder %s18, 0
      %p148 = por %p146, %p147
      %p149 = scmp.ne.s32.totalorder %s135, %s136
      %p150 = scmp.eq.s32.totalorder %s19, 1
      %p151 = por %p149, %p150
      %p153 = scmp.ne.s32.totalorder %s136, %s152
      %p154 = scmp.eq.s32.totalorder %s19, 0
      %p155 = por %p153, %p154
      %s156 = ssub.s32 %s20, %s39
      %p157 = scmp.eq.s32.totalorder %s156, 0
      %s159 = sadd.s32 %s158, 1
      %s160 = scalar_select %p157, %s158, %s159
      %p163 = pneg %p157
      %p164 = scmp.eq.s32.totalorder %s13, 1
      %p165 = por %p163, %p164
      %p166 = scmp.ne.s32.totalorder %s158, %s161
      %p167 = scmp.eq.s32.totalorder %s13, 0
      %p168 = por %p166, %p167
      %p169 = scmp.ne.s32.totalorder %s158, %s161
      %p170 = scmp.eq.s32.totalorder %s18, 1
      %p171 = por %p169, %p170
      %p172 = scmp.ne.s32.totalorder %s161, %s162
      %p173 = scmp.eq.s32.totalorder %s18, 0
      %p174 = por %p172, %p173
      %p175 = scmp.ne.s32.totalorder %s161, %s162
      %p176 = scmp.eq.s32.totalorder %s19, 1
      %p177 = por %p175, %p176
      %p179 = scmp.ne.s32.totalorder %s162, %s178
      %p180 = scmp.eq.s32.totalorder %s19, 0
      %p181 = por %p179, %p180
      %p182 = scmp.le.s32.totalorder 1, %s13
      %p183 = scmp.lt.s32.totalorder %s13, 3
      %p184 = pnand %p182, %p183
      %p185 = pneg %p184
      // Predicated region
      $region9: #{tpu_custom_call.1} parent=5 // pred_check
        _
      $region10: #{tpu_custom_call.1} parent=5 // pred_check_branch
        %187 = sbr.rel (%p184) target = $region12
      $region11: #{tpu_custom_call.1} parent=5 // pred_region
        %s188 = ssub.s32 %s13, 1
      $region12: #{tpu_custom_call.1} parent=5 // pred_fallthru
        _
      %p189 = scmp.lt.s32.totalorder %s13, 2
      // Predicated region
      $region13: #{tpu_custom_call.1} parent=5 // pred_check
        %p190 = pneg %p189
      $region14: #{tpu_custom_call.1} parent=5 // pred_check_branch
        %192 = sbr.rel (%p190) target = $region16
      $region15: #{tpu_custom_call.1} parent=5 // pred_region
        // Predicated region
        $region17: #{tpu_custom_call.1} parent=15 // pred_check
          %p193 = pneg %p56
        $region18: #{tpu_custom_call.1} parent=15 // pred_check_branch
          %195 = sbr.rel (%p193) target = $region20
        $region19: #{tpu_custom_call.1} parent=15 // pred_region
          %s196 = sadd.s32 %s20, %s22
          %s197 = smul.u32 2, %s196
          %p198 = scmp.lt.s32.totalorder %s21, 1
          %s199 = scalar_select %p198, %s21, 1
          %p200 = scmp.lt.s32.totalorder %s197, 1
          %s201 = scalar_select %p200, %s197, 1
          %s202 = smul.addr %s199, 2
          %s203 = sadd.s32 %s201, %s202
          %s204 = smul.addr %s203, 4
          %s205 = scalar_lea.vmem %s0, %s204
          %s206 = sadd.s32 %s20, %s22
          %s207 = smul.u32 2, %s206
        $region20: #{tpu_custom_call.1} parent=15 // pred_fallthru
          _
        // Predicated region
        $region21: #{tpu_custom_call.1} parent=15 // pred_check
          %p208 = pneg %p86
        $region22: #{tpu_custom_call.1} parent=15 // pred_check_branch
          %210 = sbr.rel (%p208) target = $region24
        $region23: #{tpu_custom_call.1} parent=15 // pred_region
          %s211 = sadd.s32 %s20, %s22
          %s212 = smul.u32 2, %s211
          %p213 = scmp.lt.s32.totalorder %s21, 1
          %s214 = scalar_select %p213, %s21, 1
          %p215 = scmp.lt.s32.totalorder %s212, 1
          %s216 = scalar_select %p215, %s212, 1
          %s217 = smul.addr %s214, 2
          %s218 = sadd.s32 %s216, %s217
          %s219 = smul.addr %s218, 4
          %s220 = scalar_lea.vmem %s1, %s219
          %s221 = sadd.s32 %s20, %s22
          %s222 = smul.u32 2, %s221
        $region24: #{tpu_custom_call.1} parent=15 // pred_fallthru
          _
        // Predicated region
        $region25: #{tpu_custom_call.1} parent=15 // pred_check
          %p223 = pneg %p116
        $region26: #{tpu_custom_call.1} parent=15 // pred_check_branch
          %225 = sbr.rel (%p223) target = $region28
        $region27: #{tpu_custom_call.1} parent=15 // pred_region
          %s226 = sadd.s32 %s20, %s22
          %s227 = smul.u32 2, %s226
          %p228 = scmp.lt.s32.totalorder %s21, 1
          %s229 = scalar_select %p228, %s21, 1
          %p230 = scmp.lt.s32.totalorder %s227, 1
          %s231 = scalar_select %p230, %s227, 1
          %s232 = smul.addr %s229, 2
          %s233 = sadd.s32 %s231, %s232
          %s234 = scalar_lea.vmem %s2, %s233
          %s235 = sadd.s32 %s20, %s22
          %s236 = smul.u32 2, %s235
        $region28: #{tpu_custom_call.1} parent=15 // pred_fallthru
          _
      $region16: #{tpu_custom_call.1} parent=5 // pred_fallthru
        _
      %p237 = scmp.le.s32.totalorder 1, %s13
      %p238 = scmp.lt.s32.totalorder %s13, 3
      %p239 = pnand %p237, %p238
      %p240 = pneg %p239
      // Predicated region
      $region29: #{tpu_custom_call.1} parent=5 // pred_check
        _
      $region30: #{tpu_custom_call.1} parent=5 // pred_check_branch
        %242 = sbr.rel (%p239) target = $region32
      $region31: #{tpu_custom_call.1} parent=5 // pred_region
        %s243 = ssub.s32 %s13, 1
        %s244 = sadd.s32 %s23, %s25
        %s245 = smul.u32 2, %s244
        %p246 = scmp.lt.s32.totalorder %s24, 1
        %s247 = scalar_select %p246, %s24, 1
        %p248 = scmp.lt.s32.totalorder %s245, 1
        %s249 = scalar_select %p248, %s245, 1
        %s250 = smul.addr %s247, 2
        %s251 = sadd.s32 %s249, %s250
        %s252 = smul.addr %s251, 4
        %s253 = scalar_lea.vmem %s0, %s252
        %p254 = pneg %p62
        %p255 = pneg %p59
        %s256 = sadd.s32 %s23, %s25
        %s257 = smul.u32 2, %s256
        %p258 = scmp.lt.s32.totalorder %s24, 1
        %s259 = scalar_select %p258, %s24, 1
        %p260 = scmp.lt.s32.totalorder %s257, 1
        %s261 = scalar_select %p260, %s257, 1
        %s262 = smul.addr %s259, 2
        %s263 = sadd.s32 %s261, %s262
        %s264 = smul.addr %s263, 4
        %s265 = scalar_lea.vmem %s1, %s264
        %p266 = pneg %p92
        %p267 = pneg %p89
        %s268 = sadd.s32 %s23, %s25
        %s269 = smul.u32 2, %s268
        %p270 = scmp.lt.s32.totalorder %s24, 1
        %s271 = scalar_select %p270, %s24, 1
        %p272 = scmp.lt.s32.totalorder %s269, 1
        %s273 = scalar_select %p272, %s269, 1
        %s274 = smul.addr %s271, 2
        %s275 = sadd.s32 %s273, %s274
        %s276 = scalar_lea.vmem %s2, %s275
        %p277 = pneg %p122
        %p278 = pneg %p119
        %p279 = pneg %p148
        %p280 = pneg %p145
        %p281 = pneg %p174
        %p282 = pneg %p171
        %s283 = sadd.s32 %s23, %s25
        %s284 = smul.u32 2, %s283
        %p285 = scmp.lt.s32.totalorder %s24, 1
        %s286 = scalar_select %p285, %s24, 1
        %p287 = scmp.lt.s32.totalorder %s284, 1
        %s288 = scalar_select %p287, %s284, 1
        %s289 = smul.addr %s286, 2
        %s290 = sadd.s32 %s288, %s289
        %s291 = smul.addr %s290, 4
        %s292 = scalar_lea.vmem %s0, %s291
        %s293 = sadd.s32 %s23, %s25
        %s294 = smul.u32 2, %s293
        %s295 = sadd.s32 %s23, %s25
        %s296 = smul.u32 2, %s295
        %p297 = scmp.lt.s32.totalorder %s24, 1
        %s298 = scalar_select %p297, %s24, 1
        %p299 = scmp.lt.s32.totalorder %s296, 1
        %s300 = scalar_select %p299, %s296, 1
        %s301 = smul.addr %s298, 2
        %s302 = sadd.s32 %s300, %s301
        %s303 = smul.addr %s302, 4
        %s304 = scalar_lea.vmem %s1, %s303
        %s305 = sadd.s32 %s23, %s25
        %s306 = smul.u32 2, %s305
        %s307 = sadd.s32 %s23, %s25
        %s308 = smul.u32 2, %s307
        %p309 = scmp.lt.s32.totalorder %s24, 1
        %s310 = scalar_select %p309, %s24, 1
        %p311 = scmp.lt.s32.totalorder %s308, 1
        %s312 = scalar_select %p311, %s308, 1
        %s313 = smul.addr %s310, 2
        %s314 = sadd.s32 %s312, %s313
        %s315 = scalar_lea.vmem %s2, %s314
        %s316 = sadd.s32 %s23, %s25
        %s317 = smul.u32 2, %s316
        %p318 = scmp.eq.s32.totalorder %s24, 0
        %p319 = scmp.eq.s32.totalorder %s25, 0
        %p320 = pnand %p318, %p319
        %p321 = pneg %p320
        %p322 = scmp.eq.s32.totalorder %s24, 1
        %p323 = pnand %p322, %p319
        %p324 = pneg %p323
        // Predicated region
        $region33: #{tpu_custom_call.1} parent=31 // pred_check
          _
        $region34: #{tpu_custom_call.1} parent=31 // pred_check_branch
          %326 = sbr.rel (%p320) target = $region36
        $region35: #{tpu_custom_call.1} parent=31 // pred_region
          %327 = vst [vmem:[#allocation2] sm:$0x77] 0.0
          %328 = vst [vmem:[#allocation3] sm:$0x77] 0.0
        $region36: #{tpu_custom_call.1} parent=31 // pred_fallthru
          _
        %v329 = vld [vmem:[%s292] sm:$0x77]
        %v330 = vld [vmem:[%s304] sm:$0x77]
        %v331 = vsub.f32 %v329, %v330
        %v332 = vand.u32 2147483647, %v331
        %v333 = vld [vmem:[%s315] sm:$0x3]
        %v334 = vand.u32 2147483647, %v333
        %v336 = vlaneseq
        %v337 = vshrl.u32 %v336, 7
        %v338 = vsub.s32 0, %v337
        %v339 = vrot.slane %v334, %v338
        %v340 = vlaneseq
        %v341 = vshrl.u32 %v340, 7
        %v342 = vsub.s32 1, %v341
        %v343 = vrot.slane %v334, %v342
        %v344 = vcombine.low %v339, %v343
        %v346 = vmul.f32 %v332, %v344
        %v347 = vld [vmem:[#allocation2] sm:$0x77]
        %v348 = vadd.f32 %v347, %v332
        %349 = vst [vmem:[#allocation2] sm:$0x77] %v348
        %v350 = vld [vmem:[#allocation3] sm:$0x77]
        %v351 = vadd.f32 %v350, %v346
        %352 = vst [vmem:[#allocation3] sm:$0x77] %v351
        // Predicated region
        $region37: #{tpu_custom_call.1} parent=31 // pred_check
          _
        $region38: #{tpu_custom_call.1} parent=31 // pred_check_branch
          %354 = sbr.rel (%p323) target = $region40
        $region39: #{tpu_custom_call.1} parent=31 // pred_region
          %v355 = vld [vmem:[#allocation2] sm:$0x77]
          %v357 = vcombine.high %v355, %v355
          %vm359 = vcmask 1042432
          %v360 = vsel %vm359, %v355, 0.0
          %v361 = vsel %vm359, %v357, 0.0
          %v362 = vadd.f32 %v360, %v361
          %363 = vadd.xlane.f32.xlu0 %v362
          %v364 = vpop.xlane.xlu0 %363
          %v365 = vrot.slane %v364, 4
          %v366 = vadd.f32 %v364, %v365
          %v367 = vrot.slane %v366, 2
          %v368 = vadd.f32 %v366, %v367
          %v369 = vrot.slane %v368, 1
          %v370 = vadd.f32 %v368, %v369
          %s371 = vtos %v370
          %v372 = vstv %s371
          %vm373 = vcmask 0
          %374 = vst.msk [vmem:[#allocation4] sm:$0x1] %vm373, %v372
          %v375 = vld [vmem:[#allocation3] sm:$0x77]
          %v377 = vcombine.high %v375, %v375
          %v379 = vsel %vm359, %v375, 0.0
          %v380 = vsel %vm359, %v377, 0.0
          %v381 = vadd.f32 %v379, %v380
          %382 = vadd.xlane.f32.xlu0 %v381
          %v383 = vpop.xlane.xlu0 %382
          %v384 = vrot.slane %v383, 4
          %v385 = vadd.f32 %v383, %v384
          %v386 = vrot.slane %v385, 2
          %v387 = vadd.f32 %v385, %v386
          %v388 = vrot.slane %v387, 1
          %v389 = vadd.f32 %v387, %v388
          %s390 = vtos %v389
          %v391 = vstv %s390
          %392 = vst.msk [vmem:[#allocation6] sm:$0x1] %vm373, %v391
        $region40: #{tpu_custom_call.1} parent=31 // pred_fallthru
          _
        // Predicated region
        $region41: #{tpu_custom_call.1} parent=31 // pred_check
          %p393 = pneg %p145
        $region42: #{tpu_custom_call.1} parent=31 // pred_check_branch
          %395 = sbr.rel (%p393) target = $region44
        $region43: #{tpu_custom_call.1} parent=31 // pred_region
          %s397 = ssub.s32 16, 16
          %398 = vsyncadd [#allocation5], %s397
          %s399 = smul.addr %s23, 16
          %s400 = scalar_lea.hbm %s3, %s399
          %s402 = sshll.u32 [#allocation4], 4
          %s403 = int_to_ptr.vmem [resolvable:$true] %s402
          %405 = dma.vmem_to_hbm [thread:$0]  %s403, 16, %s400, [#allocation5]
        $region44: #{tpu_custom_call.1} parent=31 // pred_fallthru
          _
        // Predicated region
        $region45: #{tpu_custom_call.1} parent=31 // pred_check
          %p406 = pneg %p171
        $region46: #{tpu_custom_call.1} parent=31 // pred_check_branch
          %408 = sbr.rel (%p406) target = $region48
        $region47: #{tpu_custom_call.1} parent=31 // pred_region
          %s410 = ssub.s32 16, 16
          %411 = vsyncadd [#allocation7], %s410
          %s412 = smul.addr %s23, 16
          %s413 = scalar_lea.hbm %s4, %s412
          %s415 = sshll.u32 [#allocation6], 4
          %s416 = int_to_ptr.vmem [resolvable:$true] %s415
          %418 = dma.vmem_to_hbm [thread:$0]  %s416, 16, %s413, [#allocation7]
        $region48: #{tpu_custom_call.1} parent=31 // pred_fallthru
          _
        // Predicated region
        $region49: #{tpu_custom_call.1} parent=31 // pred_check
          %p419 = pneg %p145
        $region50: #{tpu_custom_call.1} parent=31 // pred_check_branch
          %421 = sbr.rel (%p419) target = $region52
        $region51: #{tpu_custom_call.1} parent=31 // pred_region
          %422 = dma.done [#allocation5], 16
        $region52: #{tpu_custom_call.1} parent=31 // pred_fallthru
          _
        // Predicated region
        $region53: #{tpu_custom_call.1} parent=31 // pred_check
          %p423 = pneg %p171
        $region54: #{tpu_custom_call.1} parent=31 // pred_check_branch
          %425 = sbr.rel (%p423) target = $region56
        $region55: #{tpu_custom_call.1} parent=31 // pred_region
          %426 = dma.done [#allocation7], 16
        $region56: #{tpu_custom_call.1} parent=31 // pred_fallthru
          _
      $region32: #{tpu_custom_call.1} parent=5 // pred_fallthru
        _
      %p427 = scmp.le.s32.totalorder 2, %s13
      // Predicated region
      $region57: #{tpu_custom_call.1} parent=5 // pred_check
        %p428 = pneg %p427
      $region58: #{tpu_custom_call.1} parent=5 // pred_check_branch
        %430 = sbr.rel (%p428) target = $region60
      $region59: #{tpu_custom_call.1} parent=5 // pred_region
        %s431 = ssub.s32 %s13, 2
      $region60: #{tpu_custom_call.1} parent=5 // pred_fallthru
        _
    $region6: #{tpu_custom_call.1} parent=1 // loop_footer
      %s17 = sadd.s32 1, %s13
    $region7: #{tpu_custom_call.1} parent=1 // loop_footer_branch
      %12 = sbr.rel target = $region3
    $region8: #{tpu_custom_call.1} parent=1 // loop_exit
      _
    %432 = vsyncpa [#allocation5], 1
    %s433 = scalar_lea.sflag [#allocation5], 1
    %434 = vsyncpa %s433, 1
    %435 = vsyncpa [#allocation7], 1

</llo_original>
